<compile_context>
chip_gen: v7x
topology: tpu7x:2x2x1
jax: 0.10.0
libtpu: 0.0.40
codegen_flags: <defaults>
</compile_context>

<pallas_src>
import functools

import jax
import jax.numpy as jnp
from jax.experimental import pallas as pl
from jax.experimental.pallas import tpu as pltpu

NEG_SLOPE = 0.01   # nn.LeakyReLU() default negative_slope
LANE = 128         # lane-dense output / weight slab width
TB_MAX = 1024      # batch-tile cap for large B


def _round_up(x, m):
    return ((x + m - 1) // m) * m


def _leaky_relu(v):
    return jnp.where(v >= 0, v, NEG_SLOPE * v)


def casper_kernel(scal_ref, x_ref, wcomb_ref, heads_ref, out_ref, *,
                  n_hidden, n_out, h_pad):
    """One batch tile.

    scal_ref  : SMEM f32[max(1, H + H*(H-1)/2)]  hidden biases then cascade couplings
    x_ref     : VMEM [TB, n_in]      input features
    wcomb_ref : VMEM [n_in, 128]     cols 0:n_out = base Linear W^T,
                                     cols n_out:n_out+H = x-part of hidden weights
    heads_ref : VMEM [H_PAD, 128]    row i (<H)  = output-head Linear(1,n_out) weights,
                                     row H       = combined bias (bf + sum head biases),
                                     rows > H    = zeros
    out_ref   : VMEM [TB, 128]       lane-dense output slab (cols 0:n_out are real)
    """
    x = x_ref[...]                                                   # [TB, n_in]
    tb = x.shape[0]

    # Single MXU matmul: base output + pre-activation x-contributions, lane-dense.
    tmp = jnp.dot(x, wcomb_ref[...], preferred_element_type=jnp.float32)  # [TB, 128]

    # Sequential cascade (H is small & static -> unrolled Python loop).
    hs = []
    for i in range(n_hidden):
        pre = tmp[:, n_out + i:n_out + i + 1] + scal_ref[i]          # [TB, 1]
        tri = n_hidden + (i * (i - 1)) // 2
        for j in range(i):
            # coupling weight read from SMEM as a scalar -> VPU broadcast FMA
            pre = pre + hs[j] * scal_ref[tri + j]
        hs.append(_leaky_relu(pre))                                  # [TB, 1]

    # Assemble [TB, H_PAD]: hidden outputs, a ones column (picks up the combined
    # bias row of `heads`), zero padding to a full sublane tile.
    cols = hs + [jnp.ones((tb, 1), jnp.float32)]
    pad_cols = h_pad - (n_hidden + 1)
    if pad_cols > 0:
        cols.append(jnp.zeros((tb, pad_cols), jnp.float32))
    h_all = jnp.concatenate(cols, axis=1)                            # [TB, H_PAD]

    # Single small MXU matmul for all output heads + bias; single store to out_ref.
    out_ref[...] = tmp + jnp.dot(h_all, heads_ref[...],
                                 preferred_element_type=jnp.float32)


def _choose_tb(B):
    """Batch-tile heuristic (sublane-aligned)."""
    if B <= 256:
        return max(8, _round_up(B, 8))              # one tile
    if B <= 2 * TB_MAX:
        return _round_up(pl.cdiv(B, 2), 8)          # exactly 2 tiles (v7x: both TCs)
    return TB_MAX                                   # big B: amortize per-step overhead


def casper_forward(x, w_comb, heads, scal, *, n_hidden, n_out):
    B, n_in = x.shape
    h_pad = heads.shape[0]

    tb = _choose_tb(B)
    grid = (pl.cdiv(B, tb),)                        # partial edge block handled by Pallas

    kernel = functools.partial(casper_kernel, n_hidden=n_hidden, n_out=n_out,
                               h_pad=h_pad)

    out = pl.pallas_call(
        kernel,
        out_shape=jax.ShapeDtypeStruct((B, LANE), jnp.float32),
        grid=grid,
        in_specs=[
            pl.BlockSpec(memory_space=pltpu.MemorySpace.SMEM),       # scal (scalars)
            pl.BlockSpec((tb, n_in), lambda i: (i, 0)),              # x (batch-tiled)
            pl.BlockSpec((n_in, LANE), lambda i: (0, 0)),            # w_comb (resident)
            pl.BlockSpec((h_pad, LANE), lambda i: (0, 0)),           # heads (resident)
        ],
        out_specs=pl.BlockSpec((tb, LANE), lambda i: (i, 0)),
        compiler_params=pltpu.CompilerParams(dimension_semantics=("parallel",)),
    )(scal, x, w_comb, heads)

    # Lanes >= n_out hold pre-activation garbage by design; slice them away.
    return out[:, :n_out]


# ----------------------------------------------------------------------------
# Parameter construction (mimics nn.Linear default init) and packing.
# ----------------------------------------------------------------------------
def _torch_linear_init(key, fan_in, fan_out):
    kw, kb = jax.random.split(key)
    bound = 1.0 / jnp.sqrt(jnp.float32(fan_in))
    w = jax.random.uniform(kw, (fan_out, fan_in), jnp.float32, -bound, bound)
    b = jax.random.uniform(kb, (fan_out,), jnp.float32, -bound, bound)
    return w, b


def make_casper_params(key, n_input, n_output, n_hidden):
    """Torch-layout params for a Casper net after `n_hidden` add_neuron() calls."""
    keys = jax.random.split(key, 1 + 2 * max(1, n_hidden))
    wf, bf = _torch_linear_init(keys[0], n_input, n_output)          # [n_out,n_in],[n_out]
    hidden, outputs = [], []
    for i in range(n_hidden):
        whi, bhi = _torch_linear_init(keys[1 + 2 * i], n_input + i, 1)   # [1,n_in+i],[1]
        woi, boi = _torch_linear_init(keys[2 + 2 * i], 1, n_output)      # [n_out,1],[n_out]
        hidden.append((whi, bhi))
        outputs.append((woi, boi))
    return wf, bf, hidden, outputs


def pack_casper_params(wf, bf, hidden, outputs, n_input, n_output):
    """Pack torch-layout params into the 3 kernel operands."""
    n_hidden = len(hidden)
    assert n_output + n_hidden <= LANE, "n_output + n_hidden must fit one lane slab"

    # Combined matmul weight: [n_in, 128]
    w_comb = jnp.zeros((n_input, LANE), jnp.float32)
    w_comb = w_comb.at[:, :n_output].set(wf.T)
    for i, (whi, _) in enumerate(hidden):
        w_comb = w_comb.at[:, n_output + i].set(whi[0, :n_input])

    # Head weights + combined bias, padded to a full (8,128) sublane tile.
    h_pad = max(8, _round_up(n_hidden + 1, 8))
    heads = jnp.zeros((h_pad, LANE), jnp.float32)
    bias = bf
    for i, (woi, boi) in enumerate(outputs):
        heads = heads.at[i, :n_output].set(woi[:, 0])
        bias = bias + boi
    heads = heads.at[n_hidden, :n_output].set(bias)

    # SMEM scalars: hidden biases, then lower-triangular cascade couplings.
    n_scal = max(1, n_hidden + (n_hidden * (n_hidden - 1)) // 2)
    scal = jnp.zeros((n_scal,), jnp.float32)
    for i, (whi, bhi) in enumerate(hidden):
        scal = scal.at[i].set(bhi[0])
        tri = n_hidden + (i * (i - 1)) // 2
        for j in range(i):
            scal = scal.at[tri + j].set(whi[0, n_input + j])
    return w_comb, heads, scal


def casper_reference(x, wf, bf, hidden, outputs):
    """Pure-JAX replica of the PyTorch eval-mode forward."""
    out = x @ wf.T + bf
    hs = []
    for whi, bhi in hidden:
        inp = jnp.concatenate([x] + hs, axis=1)                      # [B, n_in + i]
        pre = inp @ whi.T + bhi
        hs.append(jnp.where(pre >= 0, pre, NEG_SLOPE * pre))
    for i, (woi, boi) in enumerate(outputs):
        out = out + hs[i] @ woi.T + boi
    return out


if __name__ == "__main__":
    B = 8
    N_INPUT = 8        # n_features (synthetic; dataframe-derived in the original)
    N_OUTPUT = 2       # n_output
    N_HIDDEN = 4       # Casper after 4 add_neuron() calls

    key = jax.random.PRNGKey(0)
    kx, kp = jax.random.split(key)
    x = jax.random.normal(kx, (B, N_INPUT), jnp.float32)

    wf, bf, hidden, outputs = make_casper_params(kp, N_INPUT, N_OUTPUT, N_HIDDEN)
    w_comb, heads, scal = pack_casper_params(wf, bf, hidden, outputs, N_INPUT, N_OUTPUT)

    out = casper_forward(x, w_comb, heads, scal, n_hidden=N_HIDDEN, n_out=N_OUTPUT)
    out = jax.block_until_ready(out)

    ref = casper_reference(x, wf, bf, hidden, outputs)
    assert out.shape == (B, N_OUTPUT)
    assert jnp.allclose(out, ref, atol=1e-5, rtol=1e-5), "kernel/reference mismatch"

    print("KERNEL_OK")
</pallas_src>

<mosaic_0001>
module attributes {stable_mosaic.version = 11 : i64} {
  func.func @casper_kernel(%arg0: i32, %arg1: memref<10xf32, #tpu.memory_space<smem>>, %arg2: memref<8x8xf32, #tpu.memory_space<vmem>>, %arg3: memref<8x128xf32, #tpu.memory_space<vmem>>, %arg4: memref<8x128xf32, #tpu.memory_space<vmem>>, %arg5: memref<8x128xf32, #tpu.memory_space<vmem>>) attributes {dimension_semantics = [#tpu.dimension_semantics<parallel>], iteration_bounds = array<i64: 1>, scalar_prefetch = 0 : i64, scratch_operands = 0 : i64, tpu.core_type = #tpu.core_type<tc>, window_params = [{transform_indices = @transform_0, window_bounds = array<i64: 10>}, {transform_indices = @transform_1, window_bounds = array<i64: 8, 8>}, {pipeline_mode = #tpu.pipeline_mode<synchronous>, transform_indices = @transform_2, window_bounds = array<i64: 8, 128>}, {pipeline_mode = #tpu.pipeline_mode<synchronous>, transform_indices = @transform_3, window_bounds = array<i64: 8, 128>}, {transform_indices = @transform_4, window_bounds = array<i64: 8, 128>}]} {
    %c0 = arith.constant 0 : index
    %c0_0 = arith.constant 0 : index
    %0 = vector.load %arg2[%c0, %c0_0] : memref<8x8xf32, #tpu.memory_space<vmem>>, vector<8x8xf32>
    %c0_1 = arith.constant 0 : index
    %c0_2 = arith.constant 0 : index
    %1 = vector.load %arg3[%c0_1, %c0_2] : memref<8x128xf32, #tpu.memory_space<vmem>>, vector<8x128xf32>
    %cst = arith.constant dense<0.000000e+00> : vector<8x128xf32>
    %2 = tpu.matmul %0, %1, %cst {dimension_numbers = #tpu.dot_dimension_numbers<[1], [0], [0], [1], [0, 0, 1, 1], [], []>} : vector<8x8xf32>, vector<8x128xf32>, vector<8x128xf32> -> vector<8x128xf32>
    %3 = vector.extract_strided_slice %2 {offsets = [0, 2], sizes = [8, 1], strides = [1, 1]} : vector<8x128xf32> to vector<8x1xf32>
    %c0_3 = arith.constant 0 : index
    %4 = memref.load %arg1[%c0_3] : memref<10xf32, #tpu.memory_space<smem>>
    %5 = vector.broadcast %4 : f32 to vector<8x1xf32>
    %6 = arith.addf %3, %5 : vector<8x1xf32>
    %cst_4 = arith.constant 0.000000e+00 : f32
    %7 = vector.broadcast %cst_4 : f32 to vector<8x1xf32>
    %8 = arith.cmpf oge, %6, %7 : vector<8x1xf32>
    %cst_5 = arith.constant 0.00999999977 : f32
    %9 = vector.broadcast %cst_5 : f32 to vector<8x1xf32>
    %10 = arith.mulf %9, %6 : vector<8x1xf32>
    %11 = arith.select %8, %6, %10 : vector<8x1xi1>, vector<8x1xf32>
    %12 = vector.extract_strided_slice %2 {offsets = [0, 3], sizes = [8, 1], strides = [1, 1]} : vector<8x128xf32> to vector<8x1xf32>
    %c1 = arith.constant 1 : index
    %13 = memref.load %arg1[%c1] : memref<10xf32, #tpu.memory_space<smem>>
    %14 = vector.broadcast %13 : f32 to vector<8x1xf32>
    %15 = arith.addf %12, %14 : vector<8x1xf32>
    %c4 = arith.constant 4 : index
    %16 = memref.load %arg1[%c4] : memref<10xf32, #tpu.memory_space<smem>>
    %17 = vector.broadcast %16 : f32 to vector<8x1xf32>
    %18 = arith.mulf %11, %17 : vector<8x1xf32>
    %19 = arith.addf %15, %18 : vector<8x1xf32>
    %cst_6 = arith.constant 0.000000e+00 : f32
    %20 = vector.broadcast %cst_6 : f32 to vector<8x1xf32>
    %21 = arith.cmpf oge, %19, %20 : vector<8x1xf32>
    %cst_7 = arith.constant 0.00999999977 : f32
    %22 = vector.broadcast %cst_7 : f32 to vector<8x1xf32>
    %23 = arith.mulf %22, %19 : vector<8x1xf32>
    %24 = arith.select %21, %19, %23 : vector<8x1xi1>, vector<8x1xf32>
    %25 = vector.extract_strided_slice %2 {offsets = [0, 4], sizes = [8, 1], strides = [1, 1]} : vector<8x128xf32> to vector<8x1xf32>
    %c2 = arith.constant 2 : index
    %26 = memref.load %arg1[%c2] : memref<10xf32, #tpu.memory_space<smem>>
    %27 = vector.broadcast %26 : f32 to vector<8x1xf32>
    %28 = arith.addf %25, %27 : vector<8x1xf32>
    %c5 = arith.constant 5 : index
    %29 = memref.load %arg1[%c5] : memref<10xf32, #tpu.memory_space<smem>>
    %30 = vector.broadcast %29 : f32 to vector<8x1xf32>
    %31 = arith.mulf %11, %30 : vector<8x1xf32>
    %32 = arith.addf %28, %31 : vector<8x1xf32>
    %c6 = arith.constant 6 : index
    %33 = memref.load %arg1[%c6] : memref<10xf32, #tpu.memory_space<smem>>
    %34 = vector.broadcast %33 : f32 to vector<8x1xf32>
    %35 = arith.mulf %24, %34 : vector<8x1xf32>
    %36 = arith.addf %32, %35 : vector<8x1xf32>
    %cst_8 = arith.constant 0.000000e+00 : f32
    %37 = vector.broadcast %cst_8 : f32 to vector<8x1xf32>
    %38 = arith.cmpf oge, %36, %37 : vector<8x1xf32>
    %cst_9 = arith.constant 0.00999999977 : f32
    %39 = vector.broadcast %cst_9 : f32 to vector<8x1xf32>
    %40 = arith.mulf %39, %36 : vector<8x1xf32>
    %41 = arith.select %38, %36, %40 : vector<8x1xi1>, vector<8x1xf32>
    %42 = vector.extract_strided_slice %2 {offsets = [0, 5], sizes = [8, 1], strides = [1, 1]} : vector<8x128xf32> to vector<8x1xf32>
    %c3 = arith.constant 3 : index
    %43 = memref.load %arg1[%c3] : memref<10xf32, #tpu.memory_space<smem>>
    %44 = vector.broadcast %43 : f32 to vector<8x1xf32>
    %45 = arith.addf %42, %44 : vector<8x1xf32>
    %c7 = arith.constant 7 : index
    %46 = memref.load %arg1[%c7] : memref<10xf32, #tpu.memory_space<smem>>
    %47 = vector.broadcast %46 : f32 to vector<8x1xf32>
    %48 = arith.mulf %11, %47 : vector<8x1xf32>
    %49 = arith.addf %45, %48 : vector<8x1xf32>
    %c8 = arith.constant 8 : index
    %50 = memref.load %arg1[%c8] : memref<10xf32, #tpu.memory_space<smem>>
    %51 = vector.broadcast %50 : f32 to vector<8x1xf32>
    %52 = arith.mulf %24, %51 : vector<8x1xf32>
    %53 = arith.addf %49, %52 : vector<8x1xf32>
    %c9 = arith.constant 9 : index
    %54 = memref.load %arg1[%c9] : memref<10xf32, #tpu.memory_space<smem>>
    %55 = vector.broadcast %54 : f32 to vector<8x1xf32>
    %56 = arith.mulf %41, %55 : vector<8x1xf32>
    %57 = arith.addf %53, %56 : vector<8x1xf32>
    %cst_10 = arith.constant 0.000000e+00 : f32
    %58 = vector.broadcast %cst_10 : f32 to vector<8x1xf32>
    %59 = arith.cmpf oge, %57, %58 : vector<8x1xf32>
    %cst_11 = arith.constant 0.00999999977 : f32
    %60 = vector.broadcast %cst_11 : f32 to vector<8x1xf32>
    %61 = arith.mulf %60, %57 : vector<8x1xf32>
    %62 = arith.select %59, %57, %61 : vector<8x1xi1>, vector<8x1xf32>
    %cst_12 = arith.constant 1.000000e+00 : f32
    %63 = vector.broadcast %cst_12 : f32 to vector<8x1xf32>
    %cst_13 = arith.constant 0.000000e+00 : f32
    %64 = vector.broadcast %cst_13 : f32 to vector<8x3xf32>
    %65 = tpu.concatenate %11, %24, %41, %62, %63, %64 in 1 : vector<8x1xf32>, vector<8x1xf32>, vector<8x1xf32>, vector<8x1xf32>, vector<8x1xf32>, vector<8x3xf32> -> vector<8x8xf32>
    %c0_14 = arith.constant 0 : index
    %c0_15 = arith.constant 0 : index
    %66 = vector.load %arg4[%c0_14, %c0_15] : memref<8x128xf32, #tpu.memory_space<vmem>>, vector<8x128xf32>
    %cst_16 = arith.constant dense<0.000000e+00> : vector<8x128xf32>
    %67 = tpu.matmul %65, %66, %cst_16 {dimension_numbers = #tpu.dot_dimension_numbers<[1], [0], [0], [1], [0, 0, 1, 1], [], []>} : vector<8x8xf32>, vector<8x128xf32>, vector<8x128xf32> -> vector<8x128xf32>
    %68 = arith.addf %2, %67 : vector<8x128xf32>
    %c0_17 = arith.constant 0 : index
    %c0_18 = arith.constant 0 : index
    %69 = vector.load %arg5[%c0_17, %c0_18] : memref<8x128xf32, #tpu.memory_space<vmem>>, vector<8x128xf32>
    tpu.vector_store %arg5[%c0_17, %c0_18], %68 {strides = array<i32>} : memref<8x128xf32, #tpu.memory_space<vmem>>, vector<8x128xf32>,
    return
  }
  func.func @transform_0(%arg0: i32) -> i32 {
    %c0_i32 = arith.constant 0 : i32
    %c0_i32_0 = arith.constant 0 : i32
    return %c0_i32 : i32
  }
  func.func @transform_1(%arg0: i32) -> (i32, i32) {
    %c0_i32 = arith.constant 0 : i32
    %c0_i32_0 = arith.constant 0 : i32
    return %arg0, %c0_i32 : i32, i32
  }
  func.func @transform_2(%arg0: i32) -> (i32, i32) {
    %c0_i32 = arith.constant 0 : i32
    %c0_i32_0 = arith.constant 0 : i32
    %c0_i32_1 = arith.constant 0 : i32
    return %c0_i32, %c0_i32_0 : i32, i32
  }
  func.func @transform_3(%arg0: i32) -> (i32, i32) {
    %c0_i32 = arith.constant 0 : i32
    %c0_i32_0 = arith.constant 0 : i32
    %c0_i32_1 = arith.constant 0 : i32
    return %c0_i32, %c0_i32_0 : i32, i32
  }
  func.func @transform_4(%arg0: i32) -> (i32, i32) {
    %c0_i32 = arith.constant 0 : i32
    %c0_i32_0 = arith.constant 0 : i32
    return %arg0, %c0_i32 : i32, i32
  }
}

</mosaic_0001>

<llo_original>
// kernel: tpu_custom_call.1
$region0: #{tpu_custom_call.1}
  #allocation0 [shape = 'u32[]', space=smem, size = 0x4, offset = 0x4, fixed_abs, tag = 'smem constant byte address 0x4 - core index']
  #allocation1 [shape = 'u32[144,128]{1,0:T(1,128)}', space=vmem, size = 0x12000, scoped, tag = 'internal scratch']
  %s0 = inlined_call_operand.hbm [shape: f32[10], index: 0, kind: input, shape index: {}]
  %s1 = inlined_call_operand.hbm [shape: f32[8,8], index: 1, kind: input, shape index: {}]
  %s2 = inlined_call_operand.hbm [shape: f32[8,128], index: 2, kind: input, shape index: {}]
  %s3 = inlined_call_operand.vmem [shape: f32[8,128], index: 3, kind: input, shape index: {}]
  %s4 = inlined_call_operand.hbm [shape: f32[8,128], index: 4, kind: output, shape index: {}]
  %s5 = sld [smem:[#allocation0]]
  $region38: #{tpu_custom_call.1} parent=0
    _
  %s7 = ssub.s32 1, %s5
  %s8 = scalar_select 0, %s7, %s5
  $region1: #{tpu_custom_call.1} parent=0
    #allocation2 [shape = 'u8[512]{0}', space=smem, size = 0x200, scoped, tag = 'input window, operand 0, single buffered']
    #allocation3 [shape = 's32[1]{0}', space=sflag, size = 0x4, scoped, tag = 'scoped memory for tpu_custom_call.1']
    #allocation4 [shape = 's32[1]{0}', space=sflag, size = 0x4, scoped, tag = 'scoped memory for tpu_custom_call.1']
    #allocation5 [shape = 's32[1]{0}', space=sflag, size = 0x4, scoped, tag = 'scoped memory for tpu_custom_call.1']
    #allocation6 [shape = 'u8[4096]{0}', space=vmem, size = 0x1000, scoped, tag = 'input window, operand 1, single buffered']
    #allocation7 [shape = 'u8[4096]{0}', space=vmem, size = 0x1000, scoped, tag = 'input window, operand 2, single buffered']
    #allocation8 [shape = 's32[1]{0}', space=sflag, size = 0x4, scoped, tag = 'scoped memory for tpu_custom_call.1']
    #allocation9 [shape = 'u8[4096]{0}', space=vmem, size = 0x1000, scoped, tag = 'output window, operand 0, single buffered']
    %9 = vsyncpa [#allocation5], 0
    %10 = vsyncpa [#allocation3], 0
    %11 = vsyncpa [#allocation8], 0
    %12 = vsyncpa [#allocation4], 0
    // Predicated region
    $region2: #{tpu_custom_call.1} parent=1 // pred_check
      _
    $region3: #{tpu_custom_call.1} parent=1 // pred_check_branch
      %14 = sbr.rel (0) target = $region5
    $region4: #{tpu_custom_call.1} parent=1 // pred_region
      %s16 = ssub.s32 16, 16
      %17 = vsyncadd [#allocation5], %s16
      %20 = dma.hbm_to_smem %s0, 16, [#allocation2], [#allocation5]
    $region5: #{tpu_custom_call.1} parent=1 // pred_fallthru
      _
    // Predicated region
    $region6: #{tpu_custom_call.1} parent=1 // pred_check
      _
    $region7: #{tpu_custom_call.1} parent=1 // pred_check_branch
      %22 = sbr.rel (0) target = $region9
    $region8: #{tpu_custom_call.1} parent=1 // pred_region
      %s24 = ssub.s32 128, 128
      %25 = vsyncadd [#allocation3], %s24
      %s27 = sshll.u32 [#allocation6], 4
      %s28 = int_to_ptr.vmem [resolvable:$true] %s27
      %30 = dma.hbm_to_vmem [thread:$0]  %s1, 128, %s28, [#allocation3]
    $region9: #{tpu_custom_call.1} parent=1 // pred_fallthru
      _
    // Predicated region
    $region10: #{tpu_custom_call.1} parent=1 // pred_check
      _
    $region11: #{tpu_custom_call.1} parent=1 // pred_check_branch
      %32 = sbr.rel (0) target = $region13
    $region12: #{tpu_custom_call.1} parent=1 // pred_region
      %s34 = ssub.s32 128, 128
      %35 = vsyncadd [#allocation8], %s34
      %s37 = sshll.u32 [#allocation7], 4
      %s38 = int_to_ptr.vmem [resolvable:$true] %s37
      %40 = dma.hbm_to_vmem [thread:$0]  %s2, 128, %s38, [#allocation8]
    $region13: #{tpu_custom_call.1} parent=1 // pred_fallthru
      _
    // Predicated region
    $region14: #{tpu_custom_call.1} parent=1 // pred_check
      _
    $region15: #{tpu_custom_call.1} parent=1 // pred_check_branch
      %42 = sbr.rel (0) target = $region17
    $region16: #{tpu_custom_call.1} parent=1 // pred_region
      _
    $region17: #{tpu_custom_call.1} parent=1 // pred_fallthru
      _
    // Predicated region
    $region18: #{tpu_custom_call.1} parent=1 // pred_check
      _
    $region19: #{tpu_custom_call.1} parent=1 // pred_check_branch
      %44 = sbr.rel (0) target = $region21
    $region20: #{tpu_custom_call.1} parent=1 // pred_region
      %45 = dma.done [#allocation5], 16
    $region21: #{tpu_custom_call.1} parent=1 // pred_fallthru
      _
    // Predicated region
    $region22: #{tpu_custom_call.1} parent=1 // pred_check
      _
    $region23: #{tpu_custom_call.1} parent=1 // pred_check_branch
      %47 = sbr.rel (0) target = $region25
    $region24: #{tpu_custom_call.1} parent=1 // pred_region
      %48 = dma.done [#allocation3], 128
    $region25: #{tpu_custom_call.1} parent=1 // pred_fallthru
      _
    // Predicated region
    $region26: #{tpu_custom_call.1} parent=1 // pred_check
      _
    $region27: #{tpu_custom_call.1} parent=1 // pred_check_branch
      %50 = sbr.rel (0) target = $region29
    $region28: #{tpu_custom_call.1} parent=1 // pred_region
      %51 = dma.done [#allocation8], 128
    $region29: #{tpu_custom_call.1} parent=1 // pred_fallthru
      _
    %52 = sfence
    %v53 = vld [vmem:[#allocation6] sm:$0xff]
    %v54 = vld [vmem:[#allocation7] sm:$0xff]
    %vm55 = vcmask 64512
    %v57 = vsel %vm55, %v53, 0
    %59 = vmatprep.subr.mxu0 0.0
    %60 = vmatpush1.msra.mxu0 %v54
    %61 = vmatprep.subr.mxu0 0.0
    %62 = vmatpush1.msra.mxu0 0.0
    %63 = vmatprep.subr.mxu0 0.0
    %64 = vmatpush1.msra.mxu0 0.0
    %65 = vmatprep.subr.mxu0 0.0
    %66 = vmatpush1.msra.mxu0 0.0
    %67 = vmatprep.subr.mxu0 0.0
    %68 = vmatpush1.msra.mxu0 0.0
    %69 = vmatprep.subr.mxu0 0.0
    %70 = vmatpush1.msra.mxu0 0.0
    %71 = vmatprep.subr.mxu0 0.0
    %72 = vmatpush1.msra.mxu0 0.0
    %73 = vmatprep.subr.mxu0 0.0
    %74 = vmatpush1.msra.mxu0 0.0
    %75 = vmatprep.subr.mxu0 0.0
    %76 = vmatpush1.msra.mxu0 0.0
    %77 = vmatprep.subr.mxu0 0.0
    %78 = vmatpush1.msra.mxu0 0.0
    %79 = vmatprep.subr.mxu0 0.0
    %80 = vmatpush1.msra.mxu0 0.0
    %81 = vmatprep.subr.mxu0 0.0
    %82 = vmatpush1.msra.mxu0 0.0
    %83 = vmatprep.subr.mxu0 0.0
    %84 = vmatpush1.msra.mxu0 0.0
    %85 = vmatprep.subr.mxu0 0.0
    %86 = vmatpush1.msra.mxu0 0.0
    %87 = vmatprep.subr.mxu0 0.0
    %88 = vmatpush1.msra.mxu0 0.0
    %89 = vmatprep.subr.mxu0 0.0
    %90 = vmatpush1.msra.mxu0 0.0
    %91 = vmatprep.subr.mxu0 0.0
    %92 = vmatpush1.msra.mxu0 0.0
    %93 = vmatprep.subr.mxu0 0.0
    %94 = vmatpush1.msra.mxu0 0.0
    %95 = vmatprep.subr.mxu0 0.0
    %96 = vmatpush1.msra.mxu0 0.0
    %97 = vmatprep.subr.mxu0 0.0
    %98 = vmatpush1.msra.mxu0 0.0
    %99 = vmatprep.subr.mxu0 0.0
    %100 = vmatpush1.msra.mxu0 0.0
    %101 = vmatprep.subr.mxu0 0.0
    %102 = vmatpush1.msra.mxu0 0.0
    %103 = vmatprep.subr.mxu0 0.0
    %104 = vmatpush1.msra.mxu0 0.0
    %105 = vmatprep.subr.mxu0 0.0
    %106 = vmatpush1.msra.mxu0 0.0
    %107 = vmatprep.subr.mxu0 0.0
    %108 = vmatpush1.msra.mxu0 0.0
    %109 = vmatprep.subr.mxu0 0.0
    %110 = vmatpush1.msra.mxu0 0.0
    %111 = vmatprep.subr.mxu0 0.0
    %112 = vmatpush1.msra.mxu0 0.0
    %113 = vmatprep.subr.mxu0 0.0
    %114 = vmatpush1.msra.mxu0 0.0
    %115 = vmatprep.subr.mxu0 0.0
    %116 = vmatpush1.msra.mxu0 0.0
    %117 = vmatprep.subr.mxu0 0.0
    %118 = vmatpush1.msra.mxu0 0.0
    %119 = vmatprep.subr.mxu0 0.0
    %120 = vmatpush1.msra.mxu0 0.0
    %121 = vmatprep.subr.mxu0 0.0
    %122 = vmatpush1.msra.mxu0 0.0
    %123 = vmatprep.mubr.f32.mxu0 0.0
    %124 = vmatmul.mubr.f32.gmra.mrb[0].mxu0 %v57
    %v125 = vpop.f32.mrb[0].mxu0
    %v126 = vadd.f32 0.0, %v125
    %v127 = vpop.f32.mrb[0].mxu0
    %128 = vdwg.mxu0
    %s129 = sld [smem:[#allocation2]]
    %v130 = vstv %s129
    %v131 = vadd.f32 %v126, %v130
    %vm132 = vcmp.ge.f32.partialorder %v131, 0.0
    %v133 = vmul.f32 %v131, 0.01
    %v134 = vsel %vm132, %v131, %v133
    %s135 = sld [smem:[#allocation2 + $0x1]]
    %v136 = vstv %s135
    %v137 = vadd.f32 %v126, %v136
    %s138 = sld [smem:[#allocation2 + $0x4]]
    %v139 = vstv %s138
    %v140 = vmul.f32 %v134, %v139
    %142 = vrot.lane.b32.xlu0 %v140, 1
    %v143 = vpop.permute.xlu0 %142
    %v145 = vadd.f32 %v137, %v143
    %vm146 = vcmp.ge.f32.partialorder %v145, 0.0
    %v147 = vmul.f32 %v145, 0.01
    %v148 = vsel %vm146, %v145, %v147
    %s149 = sld [smem:[#allocation2 + $0x2]]
    %v150 = vstv %s149
    %v151 = vadd.f32 %v126, %v150
    %s152 = sld [smem:[#allocation2 + $0x5]]
    %v153 = vstv %s152
    %v154 = vmul.f32 %v134, %v153
    %156 = vrot.lane.b32.xlu0 %v154, 2
    %v157 = vpop.permute.xlu0 %156
    %v159 = vadd.f32 %v151, %v157
    %s160 = sld [smem:[#allocation2 + $0x6]]
    %v161 = vstv %s160
    %v162 = vmul.f32 %v148, %v161
    %164 = vrot.lane.b32.xlu0 %v162, 1
    %v165 = vpop.permute.xlu0 %164
    %v167 = vadd.f32 %v159, %v165
    %vm168 = vcmp.ge.f32.partialorder %v167, 0.0
    %v169 = vmul.f32 %v167, 0.01
    %v170 = vsel %vm168, %v167, %v169
    %s171 = sld [smem:[#allocation2 + $0x3]]
    %v172 = vstv %s171
    %v173 = vadd.f32 %v126, %v172
    %s174 = sld [smem:[#allocation2 + $0x7]]
    %v175 = vstv %s174
    %v176 = vmul.f32 %v134, %v175
    %178 = vrot.lane.b32.xlu0 %v176, 3
    %v179 = vpop.permute.xlu0 %178
    %v181 = vadd.f32 %v173, %v179
    %s182 = sld [smem:[#allocation2 + $0x8]]
    %v183 = vstv %s182
    %v184 = vmul.f32 %v148, %v183
    %186 = vrot.lane.b32.xlu0 %v184, 2
    %v187 = vpop.permute.xlu0 %186
    %v189 = vadd.f32 %v181, %v187
    %s190 = sld [smem:[#allocation2 + $0x9]]
    %v191 = vstv %s190
    %v192 = vmul.f32 %v170, %v191
    %194 = vrot.lane.b32.xlu0 %v192, 1
    %v195 = vpop.permute.xlu0 %194
    %v197 = vadd.f32 %v189, %v195
    %vm198 = vcmp.ge.f32.partialorder %v197, 0.0
    %v199 = vmul.f32 %v197, 0.01
    %v200 = vsel %vm198, %v197, %v199
    %202 = vrot.lane.b32.xlu0 %v134, 126
    %v203 = vpop.permute.xlu0 %202
    %206 = vrot.lane.b32.xlu0 %v148, 126
    %v207 = vpop.permute.xlu0 %206
    %210 = vrot.lane.b32.xlu0 %v170, 126
    %v211 = vpop.permute.xlu0 %210
    %214 = vrot.lane.b32.xlu0 %v200, 126
    %v215 = vpop.permute.xlu0 %214
    %vm217 = vcmask 7168
    %v218 = vsel %vm217, %v203, %v207
    %vm219 = vcmask 15360
    %v220 = vsel %vm219, %v218, %v211
    %vm221 = vcmask 23552
    %v222 = vsel %vm221, %v220, %v215
    %vm223 = vcmask 31744
    %v224 = vsel %vm223, %v222, 1.0
    %vm225 = vcmask 39936
    %v226 = vsel %vm225, %v224, 0.0
    %v227 = vld [vmem:[%s3] sm:$0xff]
    %v229 = vsel %vm55, %v226, 0
    %231 = vmatprep.subr.mxu0 0.0
    %232 = vmatpush1.msra.mxu0 %v227
    %233 = vmatprep.subr.mxu0 0.0
    %234 = vmatpush1.msra.mxu0 0.0
    %235 = vmatprep.subr.mxu0 0.0
    %236 = vmatpush1.msra.mxu0 0.0
    %237 = vmatprep.subr.mxu0 0.0
    %238 = vmatpush1.msra.mxu0 0.0
    %239 = vmatprep.subr.mxu0 0.0
    %240 = vmatpush1.msra.mxu0 0.0
    %241 = vmatprep.subr.mxu0 0.0
    %242 = vmatpush1.msra.mxu0 0.0
    %243 = vmatprep.subr.mxu0 0.0
    %244 = vmatpush1.msra.mxu0 0.0
    %245 = vmatprep.subr.mxu0 0.0
    %246 = vmatpush1.msra.mxu0 0.0
    %247 = vmatprep.subr.mxu0 0.0
    %248 = vmatpush1.msra.mxu0 0.0
    %249 = vmatprep.subr.mxu0 0.0
    %250 = vmatpush1.msra.mxu0 0.0
    %251 = vmatprep.subr.mxu0 0.0
    %252 = vmatpush1.msra.mxu0 0.0
    %253 = vmatprep.subr.mxu0 0.0
    %254 = vmatpush1.msra.mxu0 0.0
    %255 = vmatprep.subr.mxu0 0.0
    %256 = vmatpush1.msra.mxu0 0.0
    %257 = vmatprep.subr.mxu0 0.0
    %258 = vmatpush1.msra.mxu0 0.0
    %259 = vmatprep.subr.mxu0 0.0
    %260 = vmatpush1.msra.mxu0 0.0
    %261 = vmatprep.subr.mxu0 0.0
    %262 = vmatpush1.msra.mxu0 0.0
    %263 = vmatprep.subr.mxu0 0.0
    %264 = vmatpush1.msra.mxu0 0.0
    %265 = vmatprep.subr.mxu0 0.0
    %266 = vmatpush1.msra.mxu0 0.0
    %267 = vmatprep.subr.mxu0 0.0
    %268 = vmatpush1.msra.mxu0 0.0
    %269 = vmatprep.subr.mxu0 0.0
    %270 = vmatpush1.msra.mxu0 0.0
    %271 = vmatprep.subr.mxu0 0.0
    %272 = vmatpush1.msra.mxu0 0.0
    %273 = vmatprep.subr.mxu0 0.0
    %274 = vmatpush1.msra.mxu0 0.0
    %275 = vmatprep.subr.mxu0 0.0
    %276 = vmatpush1.msra.mxu0 0.0
    %277 = vmatprep.subr.mxu0 0.0
    %278 = vmatpush1.msra.mxu0 0.0
    %279 = vmatprep.subr.mxu0 0.0
    %280 = vmatpush1.msra.mxu0 0.0
    %281 = vmatprep.subr.mxu0 0.0
    %282 = vmatpush1.msra.mxu0 0.0
    %283 = vmatprep.subr.mxu0 0.0
    %284 = vmatpush1.msra.mxu0 0.0
    %285 = vmatprep.subr.mxu0 0.0
    %286 = vmatpush1.msra.mxu0 0.0
    %287 = vmatprep.subr.mxu0 0.0
    %288 = vmatpush1.msra.mxu0 0.0
    %289 = vmatprep.subr.mxu0 0.0
    %290 = vmatpush1.msra.mxu0 0.0
    %291 = vmatprep.subr.mxu0 0.0
    %292 = vmatpush1.msra.mxu0 0.0
    %293 = vmatprep.subr.mxu0 0.0
    %294 = vmatpush1.msra.mxu0 0.0
    %295 = vmatprep.mubr.f32.mxu0 0.0
    %296 = vmatmul.mubr.f32.gmra.mrb[0].mxu0 %v229
    %v297 = vpop.f32.mrb[0].mxu0
    %v298 = vadd.f32 0.0, %v297
    %v299 = vpop.f32.mrb[0].mxu0
    %300 = vdwg.mxu0
    %v301 = vadd.f32 %v126, %v298
    %302 = vst [vmem:[#allocation9] sm:$0xff] %v301
    // Predicated region
    $region30: #{tpu_custom_call.1} parent=1 // pred_check
      _
    $region31: #{tpu_custom_call.1} parent=1 // pred_check_branch
      %304 = sbr.rel (0) target = $region33
    $region32: #{tpu_custom_call.1} parent=1 // pred_region
      %s306 = ssub.s32 128, 128
      %307 = vsyncadd [#allocation4], %s306
      %s309 = sshll.u32 [#allocation9], 4
      %s310 = int_to_ptr.vmem [resolvable:$true] %s309
      %312 = dma.vmem_to_hbm [thread:$0]  %s310, 128, %s4, [#allocation4]
    $region33: #{tpu_custom_call.1} parent=1 // pred_fallthru
      _
    // Predicated region
    $region34: #{tpu_custom_call.1} parent=1 // pred_check
      _
    $region35: #{tpu_custom_call.1} parent=1 // pred_check_branch
      %314 = sbr.rel (0) target = $region37
    $region36: #{tpu_custom_call.1} parent=1 // pred_region
      %315 = dma.done [#allocation4], 128
    $region37: #{tpu_custom_call.1} parent=1 // pred_fallthru
      _
    %316 = vsyncpa [#allocation3], 1
    %317 = vsyncpa [#allocation8], 1
    %318 = vsyncpa [#allocation4], 1
    %319 = vsyncpa [#allocation5], 1

</llo_original>
